<compile_context>
chip_gen: v5e
topology: v5e:2x2
jax: 0.10.0
libtpu: 0.0.40
codegen_flags: <defaults>
</compile_context>

<pallas_src>
import functools

import jax
import jax.numpy as jnp
from jax.experimental import pallas as pl
from jax.experimental.pallas import tpu as pltpu


def _round_up(x, m):
    return (x + m - 1) // m * m


def _conv_stats_kernel(x_ref, w_ref, mask_ref, y_ref, stats_ref, *,
                       kh, kw, row_pitch, out_len):
    """Pass 1 (one image per grid step): fused conv + BN partial statistics.

    x_ref:     (Cpad, Lx)           bf16  padded image, channels on sublanes, flat Hp*Wp on lanes
    w_ref:     (Cout, kh*kw*Cpad)   bf16  weights, columns ordered (dy, dx, channel)
    mask_ref:  (1, out_len)         f32   1.0 on valid output columns, 0.0 on junk/pad columns
    y_ref:     (Cout, out_len)      f32   conv output (spatial on lanes, incl. junk columns)
    stats_ref: (Cout, 2)            f32   per-image [sum, sum_of_squares] over valid pixels
    """
    x = x_ref[...]                                   # (Cpad, Lx) bf16
    # Form the kh*kw shifted taps from VMEM (no HBM im2col) and stack them along the
    # contraction axis -> the whole conv is ONE MXU matmul with contraction kh*kw*Cpad.
    taps = []
    for dy in range(kh):
        for dx in range(kw):
            s = dy * row_pitch + dx                  # static flat offset of this tap
            taps.append(x[:, s:s + out_len])         # (Cpad, out_len)
    p = jnp.concatenate(taps, axis=0)                # (kh*kw*Cpad, out_len) bf16

    y = jnp.dot(w_ref[...], p, preferred_element_type=jnp.float32)   # (Cout, out_len) f32
    y_ref[...] = y

    # BN partial stats over the valid pixels of this image (junk/pad columns masked out).
    m = mask_ref[...]                                # (1, out_len)
    ym = y * m
    stats_ref[:, 0:1] = jnp.sum(ym, axis=1, keepdims=True)
    stats_ref[:, 1:2] = jnp.sum(y * ym, axis=1, keepdims=True)


def _bn_lrelu_kernel(y_ref, scale_ref, shift_ref, o_ref):
    """Pass 2 (one image per grid step): y * scale + shift, then LeakyReLU(0.2)."""
    z = y_ref[...] * scale_ref[...] + shift_ref[...]
    o_ref[...] = jnp.where(z >= 0, z, 0.2 * z).astype(o_ref.dtype)


def conv_block(x_nchw, weight, bias, gamma, beta, *, stride=1, padding=1, eps=1e-5):
    """Conv_Block forward. x_nchw: (N, Cin, H, W); weight: (Cout, Cin, kh, kw).

    `bias` is accepted for API parity but is mathematically a no-op: training-mode
    BatchNorm subtracts the per-channel batch mean, which cancels any constant bias.
    """
    # TODO(synk): stride != 1 would need a strided patch layout; SRGAN's Conv_Block uses k=3, s=1, p=1.
    assert stride == 1, "conv_block Pallas kernel supports stride=1 (as used in SRGAN)"
    del bias  # cancelled exactly by the BN mean subtraction

    N, Cin, H, W = x_nchw.shape
    Cout, _, kh, kw = weight.shape
    Hp, Wp = H + 2 * padding, W + 2 * padding
    Ho, Wo = Hp - kh + 1, Wp - kw + 1
    K = kh * kw
    L = Ho * Wp                                   # per-image conv row length (incl. kw-1 junk cols/row)
    Lpad = _round_up(L, 128)                      # lane-dense output length (multiple of 128)
    max_shift = (kh - 1) * Wp + (kw - 1)
    Lx = _round_up(max(Hp * Wp, max_shift + Lpad), 128)   # flat input length (tap slices stay in-bounds)
    Cpad = _round_up(Cin, 16)                     # bf16 sublane-packing alignment for the in-kernel stack

    f32, bf16 = jnp.float32, jnp.bfloat16

    # ---------------- XLA glue: ~1x input volume, NO im2col materialisation ----------------
    xp = jnp.pad(x_nchw.astype(f32),
                 ((0, 0), (0, Cpad - Cin), (padding, padding), (padding, padding)))
    xf = xp.reshape(N, Cpad, Hp * Wp)
    xf = jnp.pad(xf, ((0, 0), (0, 0), (0, Lx - Hp * Wp))).astype(bf16)      # (N, Cpad, Lx)

    w_pad = jnp.pad(weight.astype(f32), ((0, 0), (0, Cpad - Cin), (0, 0), (0, 0)))
    w2 = jnp.transpose(w_pad, (0, 2, 3, 1)).reshape(Cout, K * Cpad).astype(bf16)

    cols = jnp.arange(Lpad)
    mask = (((cols % Wp) < Wo) & (cols < L)).astype(f32).reshape(1, Lpad)   # valid-column mask

    vmem_limit = 48 * 1024 * 1024  # explicit; leaves headroom on v7x (64 MiB physical per TC)

    # ---------------- pass 1: conv (single fused contraction) + per-image BN partials ----------------
    # TODO(synk): for very large images additionally tile rows (with halo); per-image tiles already
    #             fit comfortably in VMEM at SRGAN scales (e.g. 64ch, 96x96 ~ a few MiB per buffer).
    kern1 = functools.partial(_conv_stats_kernel, kh=kh, kw=kw, row_pitch=Wp, out_len=Lpad)
    flops1 = 2 * N * Lpad * (K * Cpad) * Cout
    bytes1 = xf.size * 2 + w2.size * 2 + mask.size * 4 + N * Cout * Lpad * 4 + N * Cout * 2 * 4
    y_flat, stats = pl.pallas_call(
        kern1,
        out_shape=(jax.ShapeDtypeStruct((N, Cout, Lpad), f32),
                   jax.ShapeDtypeStruct((N, Cout, 2), f32)),
        grid_spec=pltpu.PrefetchScalarGridSpec(
            num_scalar_prefetch=0,
            grid=(N,),
            in_specs=[
                pl.BlockSpec((None, Cpad, Lx), lambda i: (i, 0, 0)),
                pl.BlockSpec((Cout, K * Cpad), lambda i: (0, 0)),
                pl.BlockSpec((1, Lpad), lambda i: (0, 0)),
            ],
            out_specs=(
                pl.BlockSpec((None, Cout, Lpad), lambda i: (i, 0, 0)),
                pl.BlockSpec((None, Cout, 2), lambda i: (i, 0, 0)),
            ),
        ),
        compiler_params=pltpu.CompilerParams(
            dimension_semantics=("parallel",),
            vmem_limit_bytes=vmem_limit),
        cost_estimate=pl.CostEstimate(flops=flops1, transcendentals=0, bytes_accessed=bytes1),
    )(xf, w2, mask)

    # ---------------- tiny XLA op: combine per-image partials into global batch stats ----------------
    cnt = N * Ho * Wo
    sums = jnp.sum(stats, axis=0)                            # (Cout, 2)
    mean = sums[:, 0] / cnt
    var = jnp.maximum(sums[:, 1] / cnt - mean * mean, 0.0)   # biased variance (PyTorch training mode)
    inv = jax.lax.rsqrt(var + eps)
    g = gamma.astype(f32)
    scale = (g * inv).reshape(Cout, 1)
    shift = (beta.astype(f32) - g * inv * mean).reshape(Cout, 1)

    # ---------------- pass 2: normalize + LeakyReLU(0.2), lane-dense ----------------
    flops2 = 3 * N * Cout * Lpad
    bytes2 = 2 * N * Cout * Lpad * 4 + 2 * Cout * 4
    out_flat = pl.pallas_call(
        _bn_lrelu_kernel,
        out_shape=jax.ShapeDtypeStruct((N, Cout, Lpad), f32),
        grid_spec=pltpu.PrefetchScalarGridSpec(
            num_scalar_prefetch=0,
            grid=(N,),
            in_specs=[
                pl.BlockSpec((None, Cout, Lpad), lambda i: (i, 0, 0)),
                pl.BlockSpec((Cout, 1), lambda i: (0, 0)),
                pl.BlockSpec((Cout, 1), lambda i: (0, 0)),
            ],
            out_specs=pl.BlockSpec((None, Cout, Lpad), lambda i: (i, 0, 0)),
        ),
        compiler_params=pltpu.CompilerParams(
            dimension_semantics=("parallel",),
            vmem_limit_bytes=vmem_limit),
        cost_estimate=pl.CostEstimate(flops=flops2, transcendentals=0, bytes_accessed=bytes2),
    )(y_flat, scale, shift)

    # (N, Cout, Lpad) -> NCHW, dropping the lane padding and the kw-1 junk columns per row.
    return out_flat[:, :, :L].reshape(N, Cout, Ho, Wp)[:, :, :, :Wo]


def _reference(x_nchw, weight, bias, gamma, beta, *, stride=1, padding=1):
    """Pure-JAX reference: conv + training-mode BatchNorm + LeakyReLU(0.2)."""
    y = jax.lax.conv_general_dilated(
        x_nchw, weight,
        window_strides=(stride, stride),
        padding=[(padding, padding), (padding, padding)],
        dimension_numbers=("NCHW", "OIHW", "NCHW"),
    ) + bias[None, :, None, None]
    mean = jnp.mean(y, axis=(0, 2, 3), keepdims=True)
    var = jnp.mean((y - mean) ** 2, axis=(0, 2, 3), keepdims=True)
    yhat = (y - mean) * jax.lax.rsqrt(var + 1e-5)
    z = gamma[None, :, None, None] * yhat + beta[None, :, None, None]
    return jnp.where(z >= 0, z, 0.2 * z)


if __name__ == "__main__":
    # Conv_Block(in_channels=4, out_channels=8, kernel_size=3, stride=1, padding=1)
    N, Cin, H, W = 2, 4, 16, 16
    Cout, kh, kw = 8, 3, 3

    key = jax.random.PRNGKey(0)
    k1, k2, k3, k4, k5 = jax.random.split(key, 5)
    x = jax.random.normal(k1, (N, Cin, H, W), dtype=jnp.float32)
    weight = 0.1 * jax.random.normal(k2, (Cout, Cin, kh, kw), dtype=jnp.float32)
    bias = 0.1 * jax.random.normal(k3, (Cout,), dtype=jnp.float32)
    gamma = 1.0 + 0.1 * jax.random.normal(k4, (Cout,), dtype=jnp.float32)
    beta = 0.1 * jax.random.normal(k5, (Cout,), dtype=jnp.float32)

    out = jax.block_until_ready(conv_block(x, weight, bias, gamma, beta))
    assert out.shape == (N, Cout, H, W), out.shape

    # Tight check against a reference fed the same bf16-quantised MXU operands.
    xq = x.astype(jnp.bfloat16).astype(jnp.float32)
    wq = weight.astype(jnp.bfloat16).astype(jnp.float32)
    ref_q = jax.block_until_ready(_reference(xq, wq, bias, gamma, beta))
    assert jnp.allclose(out, ref_q, atol=2e-3, rtol=2e-3), float(jnp.max(jnp.abs(out - ref_q)))

    # Loose check against full-f32 module semantics (bf16 MXU operands are the only delta).
    ref = jax.block_until_ready(_reference(x, weight, bias, gamma, beta))
    assert jnp.allclose(out, ref, atol=5e-2, rtol=5e-2), float(jnp.max(jnp.abs(out - ref)))

    print("KERNEL_OK")
</pallas_src>

<mosaic_0001>
module attributes {stable_mosaic.version = 11 : i64} {
  func.func @_conv_stats_kernel(%arg0: i32, %arg1: memref<1x16x512xbf16, #tpu.memory_space<vmem>>, %arg2: memref<8x144xbf16, #tpu.memory_space<vmem>>, %arg3: memref<1x384xf32, #tpu.memory_space<vmem>>, %arg4: memref<1x8x384xf32, #tpu.memory_space<vmem>>, %arg5: memref<1x8x2xf32, #tpu.memory_space<vmem>>) attributes {dimension_semantics = [#tpu.dimension_semantics<parallel>], iteration_bounds = array<i64: 2>, scalar_prefetch = 0 : i64, scratch_operands = 0 : i64, tpu.core_type = #tpu.core_type<tc>, window_params = [{transform_indices = @transform_0, window_bounds = array<i64: 1, 16, 512>}, {pipeline_mode = #tpu.pipeline_mode<synchronous>, transform_indices = @transform_1, window_bounds = array<i64: 8, 144>}, {pipeline_mode = #tpu.pipeline_mode<synchronous>, transform_indices = @transform_2, window_bounds = array<i64: 1, 384>}, {transform_indices = @transform_3, window_bounds = array<i64: 1, 8, 384>}, {transform_indices = @transform_4, window_bounds = array<i64: 1, 8, 2>}]} {
    %c0 = arith.constant 0 : index
    %c0_0 = arith.constant 0 : index
    %c0_1 = arith.constant 0 : index
    %0 = vector.load %arg1[%c0, %c0_0, %c0_1] : memref<1x16x512xbf16, #tpu.memory_space<vmem>>, vector<1x16x512xbf16>
    %1 = vector.shape_cast %0 : vector<1x16x512xbf16> to vector<16x512xbf16>
    %2 = vector.extract_strided_slice %1 {offsets = [0, 0], sizes = [16, 384], strides = [1, 1]} : vector<16x512xbf16> to vector<16x384xbf16>
    %3 = vector.extract_strided_slice %1 {offsets = [0, 1], sizes = [16, 384], strides = [1, 1]} : vector<16x512xbf16> to vector<16x384xbf16>
    %4 = vector.extract_strided_slice %1 {offsets = [0, 2], sizes = [16, 384], strides = [1, 1]} : vector<16x512xbf16> to vector<16x384xbf16>
    %5 = vector.extract_strided_slice %1 {offsets = [0, 18], sizes = [16, 384], strides = [1, 1]} : vector<16x512xbf16> to vector<16x384xbf16>
    %6 = vector.extract_strided_slice %1 {offsets = [0, 19], sizes = [16, 384], strides = [1, 1]} : vector<16x512xbf16> to vector<16x384xbf16>
    %7 = vector.extract_strided_slice %1 {offsets = [0, 20], sizes = [16, 384], strides = [1, 1]} : vector<16x512xbf16> to vector<16x384xbf16>
    %8 = vector.extract_strided_slice %1 {offsets = [0, 36], sizes = [16, 384], strides = [1, 1]} : vector<16x512xbf16> to vector<16x384xbf16>
    %9 = vector.extract_strided_slice %1 {offsets = [0, 37], sizes = [16, 384], strides = [1, 1]} : vector<16x512xbf16> to vector<16x384xbf16>
    %10 = vector.extract_strided_slice %1 {offsets = [0, 38], sizes = [16, 384], strides = [1, 1]} : vector<16x512xbf16> to vector<16x384xbf16>
    %11 = tpu.concatenate %2, %3, %4, %5, %6, %7, %8, %9, %10 in 0 : vector<16x384xbf16>, vector<16x384xbf16>, vector<16x384xbf16>, vector<16x384xbf16>, vector<16x384xbf16>, vector<16x384xbf16>, vector<16x384xbf16>, vector<16x384xbf16>, vector<16x384xbf16> -> vector<144x384xbf16>
    %c0_2 = arith.constant 0 : index
    %c0_3 = arith.constant 0 : index
    %12 = vector.load %arg2[%c0_2, %c0_3] : memref<8x144xbf16, #tpu.memory_space<vmem>>, vector<8x144xbf16>
    %cst = arith.constant dense<0.000000e+00> : vector<8x384xf32>
    %13 = tpu.matmul %12, %11, %cst {dimension_numbers = #tpu.dot_dimension_numbers<[1], [0], [0], [1], [0, 0, 1, 1], [], []>} : vector<8x144xbf16>, vector<144x384xbf16>, vector<8x384xf32> -> vector<8x384xf32>
    %c0_4 = arith.constant 0 : index
    %c0_5 = arith.constant 0 : index
    %c0_6 = arith.constant 0 : index
    %14 = vector.load %arg4[%c0_4, %c0_5, %c0_6] : memref<1x8x384xf32, #tpu.memory_space<vmem>>, vector<1x8x384xf32>
    %15 = vector.shape_cast %14 : vector<1x8x384xf32> to vector<8x384xf32>
    %16 = vector.shape_cast %13 : vector<8x384xf32> to vector<1x8x384xf32>
    tpu.vector_store %arg4[%c0_4, %c0_5, %c0_6], %16 {strides = array<i32>} : memref<1x8x384xf32, #tpu.memory_space<vmem>>, vector<1x8x384xf32>,
    %c0_7 = arith.constant 0 : index
    %c0_8 = arith.constant 0 : index
    %17 = vector.load %arg3[%c0_7, %c0_8] : memref<1x384xf32, #tpu.memory_space<vmem>>, vector<1x384xf32>
    %18 = vector.broadcast %17 : vector<1x384xf32> to vector<8x384xf32>
    %19 = arith.mulf %13, %18 : vector<8x384xf32>
    %cst_9 = arith.constant dense<0.000000e+00> : vector<8xf32>
    %20 = vector.multi_reduction <add>, %19, %cst_9 [1] : vector<8x384xf32> to vector<8xf32>
    %21 = vector.shape_cast %20 : vector<8xf32> to vector<8x1xf32>
    %c0_10 = arith.constant 0 : index
    %c0_11 = arith.constant 0 : index
    %c0_12 = arith.constant 0 : index
    %22 = vector.load %arg5[%c0_10, %c0_11, %c0_12] : memref<1x8x2xf32, #tpu.memory_space<vmem>>, vector<1x8x1xf32>
    %23 = vector.shape_cast %22 : vector<1x8x1xf32> to vector<8x1xf32>
    %24 = vector.shape_cast %21 : vector<8x1xf32> to vector<1x8x1xf32>
    tpu.vector_store %arg5[%c0_10, %c0_11, %c0_12], %24 {strides = array<i32>} : memref<1x8x2xf32, #tpu.memory_space<vmem>>, vector<1x8x1xf32>,
    %25 = arith.mulf %13, %19 : vector<8x384xf32>
    %cst_13 = arith.constant dense<0.000000e+00> : vector<8xf32>
    %26 = vector.multi_reduction <add>, %25, %cst_13 [1] : vector<8x384xf32> to vector<8xf32>
    %27 = vector.shape_cast %26 : vector<8xf32> to vector<8x1xf32>
    %c0_14 = arith.constant 0 : index
    %c0_15 = arith.constant 0 : index
    %c1 = arith.constant 1 : index
    %28 = vector.load %arg5[%c0_14, %c0_15, %c1] : memref<1x8x2xf32, #tpu.memory_space<vmem>>, vector<1x8x1xf32>
    %29 = vector.shape_cast %28 : vector<1x8x1xf32> to vector<8x1xf32>
    %30 = vector.shape_cast %27 : vector<8x1xf32> to vector<1x8x1xf32>
    tpu.vector_store %arg5[%c0_14, %c0_15, %c1], %30 {strides = array<i32>} : memref<1x8x2xf32, #tpu.memory_space<vmem>>, vector<1x8x1xf32>,
    return
  }
  func.func @transform_0(%arg0: i32) -> (i32, i32, i32) {
    %c0_i32 = arith.constant 0 : i32
    %c0_i32_0 = arith.constant 0 : i32
    %c0_i32_1 = arith.constant 0 : i32
    return %arg0, %c0_i32, %c0_i32_0 : i32, i32, i32
  }
  func.func @transform_1(%arg0: i32) -> (i32, i32) {
    %c0_i32 = arith.constant 0 : i32
    %c0_i32_0 = arith.constant 0 : i32
    %c0_i32_1 = arith.constant 0 : i32
    return %c0_i32, %c0_i32_0 : i32, i32
  }
  func.func @transform_2(%arg0: i32) -> (i32, i32) {
    %c0_i32 = arith.constant 0 : i32
    %c0_i32_0 = arith.constant 0 : i32
    %c0_i32_1 = arith.constant 0 : i32
    return %c0_i32, %c0_i32_0 : i32, i32
  }
  func.func @transform_3(%arg0: i32) -> (i32, i32, i32) {
    %c0_i32 = arith.constant 0 : i32
    %c0_i32_0 = arith.constant 0 : i32
    %c0_i32_1 = arith.constant 0 : i32
    return %arg0, %c0_i32, %c0_i32_0 : i32, i32, i32
  }
  func.func @transform_4(%arg0: i32) -> (i32, i32, i32) {
    %c0_i32 = arith.constant 0 : i32
    %c0_i32_0 = arith.constant 0 : i32
    %c0_i32_1 = arith.constant 0 : i32
    return %arg0, %c0_i32, %c0_i32_0 : i32, i32, i32
  }
}

</mosaic_0001>

<llo_original>
// kernel: tpu_custom_call.1
$region0: #{tpu_custom_call.1}
  #allocation0 [shape = 'u32[]', space=smem, size = 0x4, offset = 0x4, fixed_abs, tag = 'smem constant byte address 0x4 - core index']
  #allocation1 [shape = 'u32[72,128]{1,0:T(1,128)}', space=vmem, size = 0x9000, scoped, tag = 'internal scratch']
  %s0 = inlined_call_operand.hbm [shape: bf16[2,16,512], index: 0, kind: input, shape index: {}]
  %s1 = inlined_call_operand.hbm [shape: bf16[8,144], index: 1, kind: input, shape index: {}]
  %s2 = inlined_call_operand.hbm [shape: f32[1,384], index: 2, kind: input, shape index: {}]
  %s3 = inlined_call_operand.hbm [shape: f32[2,8,384], index: 3, kind: output, shape index: {0}]
  %s4 = inlined_call_operand.vmem [shape: f32[2,8,2], index: 4, kind: output, shape index: {1}]
  %5 = xla_tuple %s3, %s4
  %s6 = sld [smem:[#allocation0]]
  $region65: #{tpu_custom_call.1} parent=0
    _
  %s8 = ssub.s32 1, %s6
  %s9 = scalar_select 0, %s8, %s6
  $region1: #{tpu_custom_call.1} parent=0
    #allocation2 [shape = 'u8[32768]{0}', space=vmem, size = 0x8000, scoped, tag = 'input window, operand 0']
    #allocation3 [shape = 's32[2]{0}', space=sflag, size = 0x8, scoped, tag = 'scoped memory for tpu_custom_call.1']
    #allocation4 [shape = 's32[2]{0}', space=sflag, size = 0x8, scoped, tag = 'scoped memory for tpu_custom_call.1']
    #allocation5 [shape = 'u8[4096]{0}', space=vmem, size = 0x1000, scoped, tag = 'input window, operand 1, single buffered']
    #allocation6 [shape = 's32[1]{0}', space=sflag, size = 0x4, scoped, tag = 'scoped memory for tpu_custom_call.1']
    #allocation7 [shape = 'u8[1536]{0}', space=vmem, size = 0x800, scoped, tag = 'input window, operand 2, single buffered']
    #allocation8 [shape = 'u8[24576]{0}', space=vmem, size = 0x6000, scoped, tag = 'output window, operand 0']
    %10 = vsyncpa [#allocation3], 0
    %s11 = scalar_lea.sflag [#allocation3], 1
    %12 = vsyncpa %s11, 0
    %13 = vsyncpa [#allocation6], 0
    %14 = vsyncpa [#allocation4], 0
    %s15 = scalar_lea.sflag [#allocation4], 1
    %16 = vsyncpa %s15, 0
    loop: start=0, step=1, limit=4
    $region2: #{tpu_custom_call.1} parent=1 // loop_pre_header
      _
    $region3: #{tpu_custom_call.1} parent=1 // loop_header
      %s18 = sphi 0, %s22
      %p19 = scmp.ge.s32.totalorder %s18, 4
      %s28 = sphi 0, %s30
      %s31 = sphi 0, %s28
      %s32 = sphi 0, %s31
      %s48 = sphi 0, %s32
      %s52 = sphi 0, %s52
      %s54 = sphi 0, %s52
      %s55 = sphi 0, %s54
      %s69 = sphi 0, %s55
      %s73 = sphi 0, %s73
      %s75 = sphi 0, %s73
      %s76 = sphi 0, %s75
      %s90 = sphi 0, %s76
      %s96 = sphi 0, %s98
      %s99 = sphi 0, %s96
      %s100 = sphi 0, %s99
      %s116 = sphi 0, %s100
      %s122 = sphi 0, %s124
      %s125 = sphi 0, %s122
      %s126 = sphi 0, %s125
      %s142 = sphi 0, %s126
    $region4: #{tpu_custom_call.1} parent=1 // loop_header_branch
      %21 = sbr.rel (%p19) target = $region8
    $region5: #{tpu_custom_call.1} parent=1 // loop_body
      %s23 = ssub.s32 %s18, 1
      %s24 = ssub.s32 %s18, 2
      %s25 = sadd.s32 %s18, 1
      %s26 = ssub.s32 %s18, %s25
      %p27 = scmp.eq.s32.totalorder %s26, 0
      %s29 = sadd.s32 %s28, 1
      %s30 = scalar_select %p27, %s28, %s29
      %p33 = pneg %p27
      %p34 = scmp.eq.s32.totalorder %s18, 1
      %p35 = por %p33, %p34
      %p36 = scmp.ne.s32.totalorder %s28, %s31
      %p37 = scmp.eq.s32.totalorder %s18, 0
      %p38 = por %p36, %p37
      %p39 = scmp.ne.s32.totalorder %s28, %s31
      %p40 = scmp.eq.s32.totalorder %s23, 1
      %p41 = por %p39, %p40
      %p42 = scmp.ne.s32.totalorder %s31, %s32
      %p43 = scmp.eq.s32.totalorder %s23, 0
      %p44 = por %p42, %p43
      %p45 = scmp.ne.s32.totalorder %s31, %s32
      %p46 = scmp.eq.s32.totalorder %s24, 1
      %p47 = por %p45, %p46
      %p49 = scmp.ne.s32.totalorder %s32, %s48
      %p50 = scmp.eq.s32.totalorder %s24, 0
      %p51 = por %p49, %p50
      %s53 = sadd.s32 %s52, 1
      %p56 = scmp.eq.s32.totalorder %s18, 1
      %p57 = scmp.ne.s32.totalorder %s52, %s54
      %p58 = scmp.eq.s32.totalorder %s18, 0
      %p59 = por %p57, %p58
      %p60 = scmp.ne.s32.totalorder %s52, %s54
      %p61 = scmp.eq.s32.totalorder %s23, 1
      %p62 = por %p60, %p61
      %p63 = scmp.ne.s32.totalorder %s54, %s55
      %p64 = scmp.eq.s32.totalorder %s23, 0
      %p65 = por %p63, %p64
      %p66 = scmp.ne.s32.totalorder %s54, %s55
      %p67 = scmp.eq.s32.totalorder %s24, 1
      %p68 = por %p66, %p67
      %p70 = scmp.ne.s32.totalorder %s55, %s69
      %p71 = scmp.eq.s32.totalorder %s24, 0
      %p72 = por %p70, %p71
      %s74 = sadd.s32 %s73, 1
      %p77 = scmp.eq.s32.totalorder %s18, 1
      %p78 = scmp.ne.s32.totalorder %s73, %s75
      %p79 = scmp.eq.s32.totalorder %s18, 0
      %p80 = por %p78, %p79
      %p81 = scmp.ne.s32.totalorder %s73, %s75
      %p82 = scmp.eq.s32.totalorder %s23, 1
      %p83 = por %p81, %p82
      %p84 = scmp.ne.s32.totalorder %s75, %s76
      %p85 = scmp.eq.s32.totalorder %s23, 0
      %p86 = por %p84, %p85
      %p87 = scmp.ne.s32.totalorder %s75, %s76
      %p88 = scmp.eq.s32.totalorder %s24, 1
      %p89 = por %p87, %p88
      %p91 = scmp.ne.s32.totalorder %s76, %s90
      %p92 = scmp.eq.s32.totalorder %s24, 0
      %p93 = por %p91, %p92
      %s94 = ssub.s32 %s18, %s25
      %p95 = scmp.eq.s32.totalorder %s94, 0
      %s97 = sadd.s32 %s96, 1
      %s98 = scalar_select %p95, %s96, %s97
      %p101 = pneg %p95
      %p102 = scmp.eq.s32.totalorder %s18, 1
      %p103 = por %p101, %p102
      %p104 = scmp.ne.s32.totalorder %s96, %s99
      %p105 = scmp.eq.s32.totalorder %s18, 0
      %p106 = por %p104, %p105
      %p107 = scmp.ne.s32.totalorder %s96, %s99
      %p108 = scmp.eq.s32.totalorder %s23, 1
      %p109 = por %p107, %p108
      %p110 = scmp.ne.s32.totalorder %s99, %s100
      %p111 = scmp.eq.s32.totalorder %s23, 0
      %p112 = por %p110, %p111
      %p113 = scmp.ne.s32.totalorder %s99, %s100
      %p114 = scmp.eq.s32.totalorder %s24, 1
      %p115 = por %p113, %p114
      %p117 = scmp.ne.s32.totalorder %s100, %s116
      %p118 = scmp.eq.s32.totalorder %s24, 0
      %p119 = por %p117, %p118
      %s120 = ssub.s32 %s18, %s25
      %p121 = scmp.eq.s32.totalorder %s120, 0
      %s123 = sadd.s32 %s122, 1
      %s124 = scalar_select %p121, %s122, %s123
      %p127 = pneg %p121
      %p128 = scmp.eq.s32.totalorder %s18, 1
      %p129 = por %p127, %p128
      %p130 = scmp.ne.s32.totalorder %s122, %s125
      %p131 = scmp.eq.s32.totalorder %s18, 0
      %p132 = por %p130, %p131
      %p133 = scmp.ne.s32.totalorder %s122, %s125
      %p134 = scmp.eq.s32.totalorder %s23, 1
      %p135 = por %p133, %p134
      %p136 = scmp.ne.s32.totalorder %s125, %s126
      %p137 = scmp.eq.s32.totalorder %s23, 0
      %p138 = por %p136, %p137
      %p139 = scmp.ne.s32.totalorder %s125, %s126
      %p140 = scmp.eq.s32.totalorder %s24, 1
      %p141 = por %p139, %p140
      %p143 = scmp.ne.s32.totalorder %s126, %s142
      %p144 = scmp.eq.s32.totalorder %s24, 0
      %p145 = por %p143, %p144
      %p146 = scmp.le.s32.totalorder 1, %s18
      %p147 = scmp.lt.s32.totalorder %s18, 3
      %p148 = pnand %p146, %p147
      %p149 = pneg %p148
      // Predicated region
      $region9: #{tpu_custom_call.1} parent=5 // pred_check
        _
      $region10: #{tpu_custom_call.1} parent=5 // pred_check_branch
        %151 = sbr.rel (%p148) target = $region12
      $region11: #{tpu_custom_call.1} parent=5 // pred_region
        %s152 = ssub.s32 %s18, 1
        // Predicated region
        $region13: #{tpu_custom_call.1} parent=11 // pred_check
          %p153 = pneg %p65
        $region14: #{tpu_custom_call.1} parent=11 // pred_check_branch
          %155 = sbr.rel (%p153) target = $region16
        $region15: #{tpu_custom_call.1} parent=11 // pred_region
          %157 = vsyncadd [#allocation6], 0
          %s159 = sshll.u32 %s1, 4
          %s160 = int_to_ptr.hbm [resolvable:$true] %s159
          %s161 = sshll.u32 [#allocation5], 4
          %s162 = int_to_ptr.vmem [resolvable:$true] %s161
          %164 = dma.hbm_to_vmem [thread:$0]  %s160, 128, %s162, [#allocation6]
        $region16: #{tpu_custom_call.1} parent=11 // pred_fallthru
          _
        // Predicated region
        $region17: #{tpu_custom_call.1} parent=11 // pred_check
          %p165 = pneg %p86
        $region18: #{tpu_custom_call.1} parent=11 // pred_check_branch
          %167 = sbr.rel (%p165) target = $region20
        $region19: #{tpu_custom_call.1} parent=11 // pred_region
          %169 = vsyncadd [#allocation6], 0
          %s171 = sshll.u32 %s2, 4
          %s172 = int_to_ptr.hbm [resolvable:$true] %s171
          %s173 = sshll.u32 [#allocation7], 4
          %s174 = int_to_ptr.vmem [resolvable:$true] %s173
          %176 = dma.hbm_to_vmem [thread:$0]  %s172, 48, %s174, [#allocation6]
        $region20: #{tpu_custom_call.1} parent=11 // pred_fallthru
          _
      $region12: #{tpu_custom_call.1} parent=5 // pred_fallthru
        _
      %p177 = scmp.lt.s32.totalorder %s18, 2
      // Predicated region
      $region21: #{tpu_custom_call.1} parent=5 // pred_check
        %p178 = pneg %p177
      $region22: #{tpu_custom_call.1} parent=5 // pred_check_branch
        %180 = sbr.rel (%p178) target = $region24
      $region23: #{tpu_custom_call.1} parent=5 // pred_region
        // Predicated region
        $region25: #{tpu_custom_call.1} parent=23 // pred_check
          %p181 = pneg %p38
        $region26: #{tpu_custom_call.1} parent=23 // pred_check_branch
          %183 = sbr.rel (%p181) target = $region28
        $region27: #{tpu_custom_call.1} parent=23 // pred_region
          %s184 = sand.u32 %s28, 1
          %s185 = scalar_lea.sflag [#allocation3], %s184
          %s186 = sand.u32 %s28, 1
          %s187 = smul.addr %s186, 32
          %s188 = scalar_lea.vmem [#allocation2], %s187
          %190 = vsyncadd %s185, 0
          %s191 = smul.addr %s18, 8
          %s192 = smul.addr %s191, 4
          %s193 = scalar_lea.hbm %s0, %s192
          %s194 = sshll.u32 %s193, 4
          %s195 = int_to_ptr.hbm [resolvable:$true] %s194
          %s196 = sshll.u32 %s188, 4
          %s197 = int_to_ptr.vmem [resolvable:$true] %s196
          %202 = dma.hbm_to_vmem [thread:$0]  %s195, 512, %s197, %s185, 256, 256, 16
        $region28: #{tpu_custom_call.1} parent=23 // pred_fallthru
          _
      $region24: #{tpu_custom_call.1} parent=5 // pred_fallthru
        _
      %p203 = scmp.le.s32.totalorder 1, %s18
      %p204 = scmp.lt.s32.totalorder %s18, 3
      %p205 = pnand %p203, %p204
      %p206 = pneg %p205
      // Predicated region
      $region29: #{tpu_custom_call.1} parent=5 // pred_check
        _
      $region30: #{tpu_custom_call.1} parent=5 // pred_check_branch
        %208 = sbr.rel (%p205) target = $region32
      $region31: #{tpu_custom_call.1} parent=5 // pred_region
        %s209 = ssub.s32 %s18, 1
        %s210 = sand.u32 %s31, 1
        %s211 = scalar_lea.sflag [#allocation3], %s210
        %s212 = sand.u32 %s31, 1
        %s213 = smul.addr %s212, 32
        %s214 = scalar_lea.vmem [#allocation2], %s213
        // Predicated region
        $region33: #{tpu_custom_call.1} parent=31 // pred_check
          %p215 = pneg %p44
        $region34: #{tpu_custom_call.1} parent=31 // pred_check_branch
          %217 = sbr.rel (%p215) target = $region36
        $region35: #{tpu_custom_call.1} parent=31 // pred_region
          %219 = dma.done %s211, 512
        $region36: #{tpu_custom_call.1} parent=31 // pred_fallthru
          _
        // Predicated region
        $region37: #{tpu_custom_call.1} parent=31 // pred_check
          %p220 = pneg %p65
        $region38: #{tpu_custom_call.1} parent=31 // pred_check_branch
          %222 = sbr.rel (%p220) target = $region40
        $region39: #{tpu_custom_call.1} parent=31 // pred_region
          %224 = dma.done [#allocation6], 128
        $region40: #{tpu_custom_call.1} parent=31 // pred_fallthru
          _
        // Predicated region
        $region41: #{tpu_custom_call.1} parent=31 // pred_check
          %p225 = pneg %p86
        $region42: #{tpu_custom_call.1} parent=31 // pred_check_branch
          %227 = sbr.rel (%p225) target = $region44
        $region43: #{tpu_custom_call.1} parent=31 // pred_region
          %229 = dma.done [#allocation6], 48
        $region44: #{tpu_custom_call.1} parent=31 // pred_fallthru
          _
        %s230 = sand.u32 %s31, 1
        %s231 = scalar_lea.sflag [#allocation3], %s230
        %s232 = sand.u32 %s31, 1
        %s233 = smul.addr %s232, 32
        %s234 = scalar_lea.vmem [#allocation2], %s233
        %p235 = pneg %p44
        %p236 = pneg %p41
        %p237 = pneg %p65
        %p238 = pneg %p62
        %p239 = pneg %p86
        %p240 = pneg %p83
        %p241 = pneg %p112
        %p242 = pneg %p109
        %s243 = sand.u32 %s99, 1
        %s244 = scalar_lea.sflag [#allocation4], %s243
        %s245 = sand.u32 %s99, 1
        %s246 = smul.addr %s245, 24
        %s247 = scalar_lea.vmem [#allocation8], %s246
        %p248 = pneg %p138
        %p249 = pneg %p135
        %p250 = scmp.lt.s32.totalorder %s23, 1
        %s251 = scalar_select %p250, %s23, 1
        %s252 = smul.addr %s251, 8
        %s253 = scalar_lea.vmem %s4, %s252
        %p254 = scmp.lt.s32.totalorder %s23, 1
        %s255 = scalar_select %p254, %s23, 1
        %s256 = smul.addr %s255, 8
        %s257 = scalar_lea.vmem %s4, %s256
        %v259 = vld [vmem:[%s214] sm:$0xff]
        %v260 = vld [vmem:[%s214 + $0x8] sm:$0xff]
        %v261 = vld [vmem:[%s214 + $0x10] sm:$0xff]
        %v262 = vld [vmem:[%s214 + $0x18] sm:$0xff]
        %v267 = vunpack.c.l.b16 %v259
        %v268 = vunpack.c.h.b16 %v259
        %v269 = vunpack.c.l.b16 %v260
        %v270 = vunpack.c.l.b16 %v261
        %v271 = vunpack.c.h.b16 %v261
        %v272 = vunpack.c.l.b16 %v262
        %v273 = vpack.c.b16 %v270, %v267
        %v274 = vpack.c.b16 %v271, %v268
        %v275 = vpack.c.b16 %v272, %v269
        %v279 = vunpack.c.h.b16 %v260
        %v280 = vunpack.c.h.b16 %v262
        %v281 = vpack.c.b16 %v280, %v279
        %282 = vrot.lane.b32.xlu0 %v273, 127
        %v283 = vpop.permute.xlu0 %282
        %284 = vrot.lane.b32.xlu0 %v274, 127
        %v285 = vpop.permute.xlu0 %284
        %286 = vrot.lane.b32.xlu0 %v275, 127
        %v287 = vpop.permute.xlu0 %286
        %288 = vrot.lane.b32.xlu0 %v281, 127
        %v289 = vpop.permute.xlu0 %288
        %vm290 = vcmask 1039360
        %v291 = vsel %vm290, %v283, %v285
        %v292 = vsel %vm290, %v285, %v287
        %v293 = vsel %vm290, %v287, %v289
        %297 = vrot.lane.b32.xlu0 %v273, 126
        %v298 = vpop.permute.xlu0 %297
        %299 = vrot.lane.b32.xlu0 %v274, 126
        %v300 = vpop.permute.xlu0 %299
        %301 = vrot.lane.b32.xlu0 %v275, 126
        %v302 = vpop.permute.xlu0 %301
        %303 = vrot.lane.b32.xlu0 %v281, 126
        %v304 = vpop.permute.xlu0 %303
        %vm305 = vcmask 1031168
        %v306 = vsel %vm305, %v298, %v300
        %v307 = vsel %vm305, %v300, %v302
        %v308 = vsel %vm305, %v302, %v304
        %312 = vrot.lane.b32.xlu0 %v273, 110
        %v313 = vpop.permute.xlu0 %312
        %314 = vrot.lane.b32.xlu0 %v274, 110
        %v315 = vpop.permute.xlu0 %314
        %316 = vrot.lane.b32.xlu0 %v275, 110
        %v317 = vpop.permute.xlu0 %316
        %318 = vrot.lane.b32.xlu0 %v281, 110
        %v319 = vpop.permute.xlu0 %318
        %vm320 = vcmask 900096
        %v321 = vsel %vm320, %v313, %v315
        %v322 = vsel %vm320, %v315, %v317
        %v323 = vsel %vm320, %v317, %v319
        %327 = vrot.lane.b32.xlu0 %v273, 109
        %v328 = vpop.permute.xlu0 %327
        %329 = vrot.lane.b32.xlu0 %v274, 109
        %v330 = vpop.permute.xlu0 %329
        %331 = vrot.lane.b32.xlu0 %v275, 109
        %v332 = vpop.permute.xlu0 %331
        %333 = vrot.lane.b32.xlu0 %v281, 109
        %v334 = vpop.permute.xlu0 %333
        %vm335 = vcmask 891904
        %v336 = vsel %vm335, %v328, %v330
        %v337 = vsel %vm335, %v330, %v332
        %v338 = vsel %vm335, %v332, %v334
        %342 = vrot.lane.b32.xlu0 %v273, 108
        %v343 = vpop.permute.xlu0 %342
        %344 = vrot.lane.b32.xlu0 %v274, 108
        %v345 = vpop.permute.xlu0 %344
        %346 = vrot.lane.b32.xlu0 %v275, 108
        %v347 = vpop.permute.xlu0 %346
        %348 = vrot.lane.b32.xlu0 %v281, 108
        %v349 = vpop.permute.xlu0 %348
        %vm350 = vcmask 883712
        %v351 = vsel %vm350, %v343, %v345
        %v352 = vsel %vm350, %v345, %v347
        %v353 = vsel %vm350, %v347, %v349
        %357 = vrot.lane.b32.xlu0 %v273, 92
        %v358 = vpop.permute.xlu0 %357
        %359 = vrot.lane.b32.xlu0 %v274, 92
        %v360 = vpop.permute.xlu0 %359
        %361 = vrot.lane.b32.xlu0 %v275, 92
        %v362 = vpop.permute.xlu0 %361
        %363 = vrot.lane.b32.xlu0 %v281, 92
        %v364 = vpop.permute.xlu0 %363
        %vm365 = vcmask 752640
        %v366 = vsel %vm365, %v358, %v360
        %v367 = vsel %vm365, %v360, %v362
        %v368 = vsel %vm365, %v362, %v364
        %372 = vrot.lane.b32.xlu0 %v273, 91
        %v373 = vpop.permute.xlu0 %372
        %374 = vrot.lane.b32.xlu0 %v274, 91
        %v375 = vpop.permute.xlu0 %374
        %376 = vrot.lane.b32.xlu0 %v275, 91
        %v377 = vpop.permute.xlu0 %376
        %378 = vrot.lane.b32.xlu0 %v281, 91
        %v379 = vpop.permute.xlu0 %378
        %vm380 = vcmask 744448
        %v381 = vsel %vm380, %v373, %v375
        %v382 = vsel %vm380, %v375, %v377
        %v383 = vsel %vm380, %v377, %v379
        %387 = vrot.lane.b32.xlu0 %v273, 90
        %v388 = vpop.permute.xlu0 %387
        %389 = vrot.lane.b32.xlu0 %v274, 90
        %v390 = vpop.permute.xlu0 %389
        %391 = vrot.lane.b32.xlu0 %v275, 90
        %v392 = vpop.permute.xlu0 %391
        %393 = vrot.lane.b32.xlu0 %v281, 90
        %v394 = vpop.permute.xlu0 %393
        %vm395 = vcmask 736256
        %v396 = vsel %vm395, %v388, %v390
        %v397 = vsel %vm395, %v390, %v392
        %v398 = vsel %vm395, %v392, %v394
        %v402 = vld [vmem:[#allocation5] sm:$0xff]
        %v404 = vunpack.c.l.b16 %v402
        %v405 = vunpack.c.h.b16 %v402
        %v406 = vpack.c.b16 %v404, %v404
        %v407 = vpack.c.b16 %v405, %v405
        %vm409 = vcmask 130048
        %v411 = vsel %vm409, %v407, 0
        %413 = vmatpush.bf16.msra.mxu0 %v381
        %414 = vmatpush.bf16.msra.mxu0 %v366
        %415 = vmatpush.bf16.msra.mxu0 %v351
        %416 = vmatpush.bf16.msra.mxu0 %v336
        %417 = vmatpush.bf16.msra.mxu0 %v321
        %418 = vmatpush.bf16.msra.mxu0 %v306
        %419 = vmatpush.bf16.msra.mxu0 %v291
        %420 = vmatpush.bf16.msra.mxu0 %v273
        %421 = vmatmul.bf16.gmra.mxu0 %v406
        %v422 = vpop.f32.mrf.mxu0
        %v423 = vadd.f32 0.0, %v422
        %v424 = vpop.f32.mrf.mxu0
        %425 = vdwg.mxu0
        %426 = vmatpush.bf16.msra.mxu0 0
        %427 = vmatpush.bf16.msra.mxu0 0
        %428 = vmatpush.bf16.msra.mxu0 0
        %429 = vmatpush.bf16.msra.mxu0 0
        %430 = vmatpush.bf16.msra.mxu0 0
        %431 = vmatpush.bf16.msra.mxu0 0
        %432 = vmatpush.bf16.msra.mxu0 0
        %433 = vmatpush.bf16.msra.mxu0 %v396
        %434 = vmatmul.bf16.gmra.mxu0 %v411
        %v435 = vpop.f32.mrf.mxu0
        %v436 = vadd.f32 %v423, %v435
        %v437 = vpop.f32.mrf.mxu0
        %438 = vdwg.mxu0
        %439 = vmatpush.bf16.msra.mxu0 %v382
        %440 = vmatpush.bf16.msra.mxu0 %v367
        %441 = vmatpush.bf16.msra.mxu0 %v352
        %442 = vmatpush.bf16.msra.mxu0 %v337
        %443 = vmatpush.bf16.msra.mxu0 %v322
        %444 = vmatpush.bf16.msra.mxu0 %v307
        %445 = vmatpush.bf16.msra.mxu0 %v292
        %446 = vmatpush.bf16.msra.mxu0 %v274
        %447 = vmatmul.bf16.gmra.mxu0 %v406
        %v448 = vpop.f32.mrf.mxu0
        %v449 = vadd.f32 0.0, %v448
        %v450 = vpop.f32.mrf.mxu0
        %451 = vdwg.mxu0
        %452 = vmatpush.bf16.msra.mxu0 0
        %453 = vmatpush.bf16.msra.mxu0 0
        %454 = vmatpush.bf16.msra.mxu0 0
        %455 = vmatpush.bf16.msra.mxu0 0
        %456 = vmatpush.bf16.msra.mxu0 0
        %457 = vmatpush.bf16.msra.mxu0 0
        %458 = vmatpush.bf16.msra.mxu0 0
        %459 = vmatpush.bf16.msra.mxu0 %v397
        %460 = vmatmul.bf16.gmra.mxu0 %v411
        %v461 = vpop.f32.mrf.mxu0
        %v462 = vadd.f32 %v449, %v461
        %v463 = vpop.f32.mrf.mxu0
        %464 = vdwg.mxu0
        %465 = vmatpush.bf16.msra.mxu0 %v383
        %466 = vmatpush.bf16.msra.mxu0 %v368
        %467 = vmatpush.bf16.msra.mxu0 %v353
        %468 = vmatpush.bf16.msra.mxu0 %v338
        %469 = vmatpush.bf16.msra.mxu0 %v323
        %470 = vmatpush.bf16.msra.mxu0 %v308
        %471 = vmatpush.bf16.msra.mxu0 %v293
        %472 = vmatpush.bf16.msra.mxu0 %v275
        %473 = vmatmul.bf16.gmra.mxu0 %v406
        %v474 = vpop.f32.mrf.mxu0
        %v475 = vadd.f32 0.0, %v474
        %v476 = vpop.f32.mrf.mxu0
        %477 = vdwg.mxu0
        %478 = vmatpush.bf16.msra.mxu0 0
        %479 = vmatpush.bf16.msra.mxu0 0
        %480 = vmatpush.bf16.msra.mxu0 0
        %481 = vmatpush.bf16.msra.mxu0 0
        %482 = vmatpush.bf16.msra.mxu0 0
        %483 = vmatpush.bf16.msra.mxu0 0
        %484 = vmatpush.bf16.msra.mxu0 0
        %485 = vmatpush.bf16.msra.mxu0 %v398
        %486 = vmatmul.bf16.gmra.mxu0 %v411
        %v487 = vpop.f32.mrf.mxu0
        %v488 = vadd.f32 %v475, %v487
        %v489 = vpop.f32.mrf.mxu0
        %490 = vdwg.mxu0
        %491 = vst [vmem:[%s247] sm:$0xff] %v436
        %492 = vst [vmem:[%s247 + $0x8] sm:$0xff] %v462
        %493 = vst [vmem:[%s247 + $0x10] sm:$0xff] %v488
        %v494 = vld [vmem:[#allocation7] sm:$0x7]
        %v496 = vperm.slane %v494, 0
        %v497 = vperm.slane %v494, 1
        %v498 = vperm.slane %v494, 2
        %v502 = vmul.f32 %v436, %v496
        %v503 = vmul.f32 %v462, %v497
        %v504 = vmul.f32 %v488, %v498
        %v505 = vadd.f32 %v502, %v503
        %v506 = vadd.f32 %v505, %v504
        %507 = vadd.xlane.f32.xlu0 %v506
        %v508 = vpop.xlane.xlu0 %507
        %vm509 = vcmask 7168
        %510 = vst.msk [vmem:[%s257] sm:$0xff] %vm509, %v508
        %v511 = vmul.f32 %v436, %v502
        %v512 = vmul.f32 %v462, %v503
        %v513 = vmul.f32 %v488, %v504
        %v514 = vadd.f32 %v511, %v512
        %v515 = vadd.f32 %v514, %v513
        %516 = vadd.xlane.f32.xlu0 %v515
        %v517 = vpop.xlane.xlu0 %516
        %vm518 = vcmask 15368
        %519 = vst.msk [vmem:[%s257] sm:$0xff] %vm518, %v517
        %s520 = sand.u32 %s99, 1
        %s521 = scalar_lea.sflag [#allocation4], %s520
        %s522 = sand.u32 %s99, 1
        %s523 = smul.addr %s522, 24
        %s524 = scalar_lea.vmem [#allocation8], %s523
        %p525 = scmp.lt.s32.totalorder %s23, 1
        %s526 = scalar_select %p525, %s23, 1
        %s527 = smul.addr %s526, 8
        %s528 = scalar_lea.vmem %s4, %s527
        // Predicated region
        $region45: #{tpu_custom_call.1} parent=31 // pred_check
          %p529 = pneg %p109
        $region46: #{tpu_custom_call.1} parent=31 // pred_check_branch
          %531 = sbr.rel (%p529) target = $region48
        $region47: #{tpu_custom_call.1} parent=31 // pred_region
          %533 = vsyncadd %s521, 0
          %s534 = smul.addr %s23, 3
          %s535 = smul.addr %s534, 8
          %s536 = scalar_lea.hbm %s3, %s535
          %s538 = sshll.u32 %s524, 4
          %s539 = int_to_ptr.vmem [resolvable:$true] %s538
          %s540 = sshll.u32 %s536, 4
          %s541 = int_to_ptr.hbm [resolvable:$true] %s540
          %543 = dma.vmem_to_hbm [thread:$0]  %s539, 384, %s541, %s521
        $region48: #{tpu_custom_call.1} parent=31 // pred_fallthru
          _
        // Predicated region
        $region49: #{tpu_custom_call.1} parent=31 // pred_check
          %p544 = pneg %p135
        $region50: #{tpu_custom_call.1} parent=31 // pred_check_branch
          %546 = sbr.rel (%p544) target = $region52
        $region51: #{tpu_custom_call.1} parent=31 // pred_region
          _
        $region52: #{tpu_custom_call.1} parent=31 // pred_fallthru
          _
      $region32: #{tpu_custom_call.1} parent=5 // pred_fallthru
        _
      %p547 = scmp.le.s32.totalorder 2, %s18
      // Predicated region
      $region53: #{tpu_custom_call.1} parent=5 // pred_check
        %p548 = pneg %p547
      $region54: #{tpu_custom_call.1} parent=5 // pred_check_branch
        %550 = sbr.rel (%p548) target = $region56
      $region55: #{tpu_custom_call.1} parent=5 // pred_region
        %s551 = ssub.s32 %s18, 2
        // Predicated region
        $region57: #{tpu_custom_call.1} parent=55 // pred_check
          %p552 = pneg %p115
        $region58: #{tpu_custom_call.1} parent=55 // pred_check_branch
          %554 = sbr.rel (%p552) target = $region60
        $region59: #{tpu_custom_call.1} parent=55 // pred_region
          %s555 = sand.u32 %s100, 1
          %s556 = scalar_lea.sflag [#allocation4], %s555
          %s557 = sand.u32 %s100, 1
          %s558 = smul.addr %s557, 24
          %s559 = scalar_lea.vmem [#allocation8], %s558
          %561 = dma.done %s556, 384
        $region60: #{tpu_custom_call.1} parent=55 // pred_fallthru
          _
        // Predicated region
        $region61: #{tpu_custom_call.1} parent=55 // pred_check
          %p562 = pneg %p141
        $region62: #{tpu_custom_call.1} parent=55 // pred_check_branch
          %564 = sbr.rel (%p562) target = $region64
        $region63: #{tpu_custom_call.1} parent=55 // pred_region
          %p565 = scmp.lt.s32.totalorder %s24, 1
          %s566 = scalar_select %p565, %s24, 1
          %s567 = smul.addr %s566, 8
          %s568 = scalar_lea.vmem %s4, %s567
        $region64: #{tpu_custom_call.1} parent=55 // pred_fallthru
          _
      $region56: #{tpu_custom_call.1} parent=5 // pred_fallthru
        _
    $region6: #{tpu_custom_call.1} parent=1 // loop_footer
      %s22 = sadd.s32 1, %s18
    $region7: #{tpu_custom_call.1} parent=1 // loop_footer_branch
      %17 = sbr.rel target = $region3
    $region8: #{tpu_custom_call.1} parent=1 // loop_exit
      _
    %569 = vsyncpa [#allocation3], 1
    %s570 = scalar_lea.sflag [#allocation3], 1
    %571 = vsyncpa %s570, 1
    %572 = vsyncpa [#allocation6], 1
    %573 = vsyncpa [#allocation4], 1
    %s574 = scalar_lea.sflag [#allocation4], 1
    %575 = vsyncpa %s574, 1

</llo_original>
